<compile_context>
chip_gen: v6e
topology: v6e:2x2x1
jax: 0.10.0
libtpu: 0.0.40
codegen_flags: <defaults>
</compile_context>

<pallas_src>
import math

import jax
import jax.numpy as jnp
from jax import lax
from jax.experimental import pallas as pl
from jax.experimental.pallas import tpu as pltpu

_INV_SQRT2 = 1.0 / math.sqrt(2.0)


def _round_up(x, m):
    return (x + m - 1) // m * m


def _make_kernel(act_func):
    def kernel(x_ref, w1_ref, b1_ref, w2_ref, b2_ref, o_ref):
        # x tile (TM, Hp) bf16; weights bf16; biases f32 (1, N) rows.
        x = x_ref[...]
        h = jnp.dot(x, w1_ref[...], preferred_element_type=jnp.float32)
        h = h + b1_ref[...]                        # implicit (1, Ip) broadcast
        if act_func == "gelu":
            # exact erf-GELU (matches torch F.gelu default), runs on EUP/VPU
            h = 0.5 * h * (1.0 + lax.erf(h * _INV_SQRT2))
        elif act_func == "relu":
            h = jnp.maximum(h, 0.0)
        elif act_func == "tanh":
            h = jnp.tanh(h)
        else:
            raise ValueError(f"unsupported act_func: {act_func}")
        # TODO(synk): training-mode dropout (pltpu.prng_random_bits + mask/scale)
        # omitted; nn.Dropout is identity at inference.
        y = jnp.dot(h.astype(w2_ref.dtype), w2_ref[...],
                    preferred_element_type=jnp.float32)
        y = y + b2_ref[...]
        o_ref[...] = y.astype(o_ref.dtype)
    return kernel


def multi_nonlinear_classifier(x, w1, b1, w2, b2, *, act_func="gelu",
                               compute_dtype=jnp.bfloat16, tm=512):
    """x: [B, S, H]; w1: [H, I]; b1: [I]; w2: [I, L]; b2: [L] -> [B, S, L].

    Weights are (in_features, out_features), i.e. transposed vs nn.Linear.weight.
    """
    B, S, H = x.shape
    I = w1.shape[1]
    L = w2.shape[1]
    M = B * S

    # Pad contraction / output dims to lane width (128) and tokens to the tile.
    Hp = _round_up(H, 128)
    Ip = _round_up(I, 128)
    Lp = _round_up(L, 128)
    TM = min(tm, _round_up(M, 8))
    Mp = _round_up(M, TM)

    out_dtype = x.dtype

    xf = x.reshape(M, H).astype(compute_dtype)
    xp = jnp.zeros((Mp, Hp), compute_dtype).at[:M, :H].set(xf)
    w1p = jnp.zeros((Hp, Ip), compute_dtype).at[:H, :I].set(w1.astype(compute_dtype))
    w2p = jnp.zeros((Ip, Lp), compute_dtype).at[:I, :L].set(w2.astype(compute_dtype))
    b1p = jnp.zeros((1, Ip), jnp.float32).at[0, :I].set(b1.astype(jnp.float32))
    b2p = jnp.zeros((1, Lp), jnp.float32).at[0, :L].set(b2.astype(jnp.float32))

    itemsize_c = jnp.dtype(compute_dtype).itemsize
    itemsize_o = jnp.dtype(out_dtype).itemsize
    cost = pl.CostEstimate(
        flops=int(2 * Mp * (Hp * Ip + Ip * Lp)),
        transcendentals=int(Mp * Ip),
        bytes_accessed=int(Mp * Hp * itemsize_c + Hp * Ip * itemsize_c
                           + Ip * Lp * itemsize_c + (Ip + Lp) * 4
                           + Mp * Lp * itemsize_o),
    )

    out = pl.pallas_call(
        _make_kernel(act_func),
        out_shape=jax.ShapeDtypeStruct((Mp, Lp), out_dtype),
        grid=(Mp // TM,),
        in_specs=[
            pl.BlockSpec((TM, Hp), lambda i: (i, 0)),   # streamed per tile
            pl.BlockSpec((Hp, Ip), lambda i: (0, 0)),   # resident weights
            pl.BlockSpec((1, Ip), lambda i: (0, 0)),    # resident bias
            pl.BlockSpec((Ip, Lp), lambda i: (0, 0)),   # resident weights
            pl.BlockSpec((1, Lp), lambda i: (0, 0)),    # resident bias
        ],
        out_specs=pl.BlockSpec((TM, Lp), lambda i: (i, 0)),
        compiler_params=pltpu.CompilerParams(
            # parallel -> megacore sharding on v7x (free on v5e/v6e);
            # 48 MiB scoped VMEM fits v7x's 64 MiB physical with headroom and
            # raises the tighter v5e/v6e defaults.
            dimension_semantics=("parallel",),
            vmem_limit_bytes=48 << 20,
        ),
        cost_estimate=cost,
    )(xp, w1p, b1p, w2p, b2p)

    return out[:M, :L].reshape(B, S, L)


def _init_linear_params(key, fan_in, fan_out):
    # Deterministic init matching nn.Linear's kaiming-uniform bounds.
    kw, kb = jax.random.split(key)
    bound = 1.0 / math.sqrt(fan_in)
    w = jax.random.uniform(kw, (fan_in, fan_out), jnp.float32, -bound, bound)
    b = jax.random.uniform(kb, (fan_out,), jnp.float32, -bound, bound)
    return w, b


if __name__ == "__main__":
    # Small shapes: batch=2, seq=8, hidden=32, intermediate=32, num_label=8
    B, S, H = 2, 8, 32
    I, L = 32, 8

    key = jax.random.PRNGKey(0)
    kx, k1, k2 = jax.random.split(key, 3)
    x = jax.random.normal(kx, (B, S, H), jnp.float32)
    w1, b1 = _init_linear_params(k1, H, I)   # classifier1
    w2, b2 = _init_linear_params(k2, I, L)   # classifier2

    out = multi_nonlinear_classifier(x, w1, b1, w2, b2)
    out = jax.block_until_ready(out)

    # Reference 1: mirrors the kernel's math (bf16 operands, f32 accumulate).
    xb = x.reshape(B * S, H).astype(jnp.bfloat16)
    w1b = w1.astype(jnp.bfloat16)
    w2b = w2.astype(jnp.bfloat16)
    h = jnp.dot(xb, w1b, preferred_element_type=jnp.float32) + b1
    h = 0.5 * h * (1.0 + lax.erf(h * _INV_SQRT2))
    ref_bf16 = (jnp.dot(h.astype(jnp.bfloat16), w2b,
                        preferred_element_type=jnp.float32) + b2).reshape(B, S, L)
    assert jnp.allclose(out, ref_bf16, atol=2e-3, rtol=2e-3), \
        "mismatch vs bf16-matched reference"

    # Reference 2: full-f32 forward, loose tolerance (bf16 operand rounding).
    hf = x.reshape(B * S, H) @ w1 + b1
    hf = 0.5 * hf * (1.0 + lax.erf(hf * _INV_SQRT2))
    ref_f32 = (hf @ w2 + b2).reshape(B, S, L)
    assert jnp.allclose(out, ref_f32, atol=5e-2, rtol=5e-2), \
        "mismatch vs f32 reference"

    print("KERNEL_OK")
</pallas_src>

<mosaic_0001>
module attributes {stable_mosaic.version = 11 : i64} {
  func.func @kernel(%arg0: i32, %arg1: memref<16x128xbf16, #tpu.memory_space<vmem>>, %arg2: memref<128x128xbf16, #tpu.memory_space<vmem>>, %arg3: memref<1x128xf32, #tpu.memory_space<vmem>>, %arg4: memref<128x128xbf16, #tpu.memory_space<vmem>>, %arg5: memref<1x128xf32, #tpu.memory_space<vmem>>, %arg6: memref<16x128xf32, #tpu.memory_space<vmem>>) attributes {dimension_semantics = [#tpu.dimension_semantics<parallel>], iteration_bounds = array<i64: 1>, scalar_prefetch = 0 : i64, scratch_operands = 0 : i64, tpu.core_type = #tpu.core_type<tc>, window_params = [{transform_indices = @transform_0, window_bounds = array<i64: 16, 128>}, {pipeline_mode = #tpu.pipeline_mode<synchronous>, transform_indices = @transform_1, window_bounds = array<i64: 128, 128>}, {pipeline_mode = #tpu.pipeline_mode<synchronous>, transform_indices = @transform_2, window_bounds = array<i64: 1, 128>}, {pipeline_mode = #tpu.pipeline_mode<synchronous>, transform_indices = @transform_3, window_bounds = array<i64: 128, 128>}, {pipeline_mode = #tpu.pipeline_mode<synchronous>, transform_indices = @transform_4, window_bounds = array<i64: 1, 128>}, {transform_indices = @transform_5, window_bounds = array<i64: 16, 128>}]} {
    %c0 = arith.constant 0 : index
    %c0_0 = arith.constant 0 : index
    %0 = vector.load %arg1[%c0, %c0_0] : memref<16x128xbf16, #tpu.memory_space<vmem>>, vector<16x128xbf16>
    %c0_1 = arith.constant 0 : index
    %c0_2 = arith.constant 0 : index
    %1 = vector.load %arg2[%c0_1, %c0_2] : memref<128x128xbf16, #tpu.memory_space<vmem>>, vector<128x128xbf16>
    %cst = arith.constant dense<0.000000e+00> : vector<16x128xf32>
    %2 = tpu.matmul %0, %1, %cst {dimension_numbers = #tpu.dot_dimension_numbers<[1], [0], [0], [1], [0, 0, 1, 1], [], []>} : vector<16x128xbf16>, vector<128x128xbf16>, vector<16x128xf32> -> vector<16x128xf32>
    %c0_3 = arith.constant 0 : index
    %c0_4 = arith.constant 0 : index
    %3 = vector.load %arg3[%c0_3, %c0_4] : memref<1x128xf32, #tpu.memory_space<vmem>>, vector<1x128xf32>
    %4 = vector.broadcast %3 : vector<1x128xf32> to vector<16x128xf32>
    %5 = arith.addf %2, %4 : vector<16x128xf32>
    %cst_5 = arith.constant 5.000000e-01 : f32
    %6 = vector.broadcast %cst_5 : f32 to vector<16x128xf32>
    %7 = arith.mulf %6, %5 : vector<16x128xf32>
    %cst_6 = arith.constant 0.707106769 : f32
    %8 = vector.broadcast %cst_6 : f32 to vector<16x128xf32>
    %9 = arith.mulf %5, %8 : vector<16x128xf32>
    %10 = math.erf %9 : vector<16x128xf32>
    %cst_7 = arith.constant 1.000000e+00 : f32
    %11 = vector.broadcast %cst_7 : f32 to vector<16x128xf32>
    %12 = arith.addf %11, %10 : vector<16x128xf32>
    %13 = arith.mulf %7, %12 : vector<16x128xf32>
    %14 = arith.truncf %13 : vector<16x128xf32> to vector<16x128xbf16>
    %c0_8 = arith.constant 0 : index
    %c0_9 = arith.constant 0 : index
    %15 = vector.load %arg4[%c0_8, %c0_9] : memref<128x128xbf16, #tpu.memory_space<vmem>>, vector<128x128xbf16>
    %cst_10 = arith.constant dense<0.000000e+00> : vector<16x128xf32>
    %16 = tpu.matmul %14, %15, %cst_10 {dimension_numbers = #tpu.dot_dimension_numbers<[1], [0], [0], [1], [0, 0, 1, 1], [], []>} : vector<16x128xbf16>, vector<128x128xbf16>, vector<16x128xf32> -> vector<16x128xf32>
    %c0_11 = arith.constant 0 : index
    %c0_12 = arith.constant 0 : index
    %17 = vector.load %arg5[%c0_11, %c0_12] : memref<1x128xf32, #tpu.memory_space<vmem>>, vector<1x128xf32>
    %18 = vector.broadcast %17 : vector<1x128xf32> to vector<16x128xf32>
    %19 = arith.addf %16, %18 : vector<16x128xf32>
    %c0_13 = arith.constant 0 : index
    %c0_14 = arith.constant 0 : index
    %20 = vector.load %arg6[%c0_13, %c0_14] : memref<16x128xf32, #tpu.memory_space<vmem>>, vector<16x128xf32>
    tpu.vector_store %arg6[%c0_13, %c0_14], %19 {strides = array<i32>} : memref<16x128xf32, #tpu.memory_space<vmem>>, vector<16x128xf32>,
    return
  }
  func.func @transform_0(%arg0: i32) -> (i32, i32) {
    %c0_i32 = arith.constant 0 : i32
    %c0_i32_0 = arith.constant 0 : i32
    return %arg0, %c0_i32 : i32, i32
  }
  func.func @transform_1(%arg0: i32) -> (i32, i32) {
    %c0_i32 = arith.constant 0 : i32
    %c0_i32_0 = arith.constant 0 : i32
    %c0_i32_1 = arith.constant 0 : i32
    return %c0_i32, %c0_i32_0 : i32, i32
  }
  func.func @transform_2(%arg0: i32) -> (i32, i32) {
    %c0_i32 = arith.constant 0 : i32
    %c0_i32_0 = arith.constant 0 : i32
    %c0_i32_1 = arith.constant 0 : i32
    return %c0_i32, %c0_i32_0 : i32, i32
  }
  func.func @transform_3(%arg0: i32) -> (i32, i32) {
    %c0_i32 = arith.constant 0 : i32
    %c0_i32_0 = arith.constant 0 : i32
    %c0_i32_1 = arith.constant 0 : i32
    return %c0_i32, %c0_i32_0 : i32, i32
  }
  func.func @transform_4(%arg0: i32) -> (i32, i32) {
    %c0_i32 = arith.constant 0 : i32
    %c0_i32_0 = arith.constant 0 : i32
    %c0_i32_1 = arith.constant 0 : i32
    return %c0_i32, %c0_i32_0 : i32, i32
  }
  func.func @transform_5(%arg0: i32) -> (i32, i32) {
    %c0_i32 = arith.constant 0 : i32
    %c0_i32_0 = arith.constant 0 : i32
    return %arg0, %c0_i32 : i32, i32
  }
}

</mosaic_0001>

<llo_original>
// kernel: tpu_custom_call.1
$region0: #{tpu_custom_call.1}
  #allocation0 [shape = 'u32[]', space=smem, size = 0x4, offset = 0x4, fixed_abs, tag = 'smem constant byte address 0x4 - core index']
  #allocation1 [shape = 'u32[144,128]{1,0:T(1,128)}', space=vmem, size = 0x12000, scoped, tag = 'internal scratch']
  %s0 = inlined_call_operand.hbm [shape: bf16[16,128], index: 0, kind: input, shape index: {}]
  %s1 = inlined_call_operand.hbm [shape: bf16[128,128], index: 1, kind: input, shape index: {}]
  %s2 = inlined_call_operand.vmem [shape: f32[1,128], index: 2, kind: input, shape index: {}]
  %s3 = inlined_call_operand.hbm [shape: bf16[128,128], index: 3, kind: input, shape index: {}]
  %s4 = inlined_call_operand.vmem [shape: f32[1,128], index: 4, kind: input, shape index: {}]
  %s5 = inlined_call_operand.hbm [shape: f32[16,128], index: 5, kind: output, shape index: {}]
  %s6 = sld [smem:[#allocation0]]
  $region42: #{tpu_custom_call.1} parent=0
    _
  %s8 = ssub.s32 1, %s6
  %s9 = scalar_select 0, %s8, %s6
  $region1: #{tpu_custom_call.1} parent=0
    #allocation2 [shape = 'u8[4096]{0}', space=vmem, size = 0x1000, scoped, tag = 'input window, operand 0, single buffered']
    #allocation3 [shape = 's32[1]{0}', space=sflag, size = 0x4, scoped, tag = 'scoped memory for tpu_custom_call.1']
    #allocation4 [shape = 's32[1]{0}', space=sflag, size = 0x4, scoped, tag = 'scoped memory for tpu_custom_call.1']
    #allocation5 [shape = 'u8[32768]{0}', space=vmem, size = 0x8000, scoped, tag = 'input window, operand 1, single buffered']
    #allocation6 [shape = 's32[1]{0}', space=sflag, size = 0x4, scoped, tag = 'scoped memory for tpu_custom_call.1']
    #allocation7 [shape = 'u8[32768]{0}', space=vmem, size = 0x8000, scoped, tag = 'input window, operand 3, single buffered']
    #allocation8 [shape = 'u8[8192]{0}', space=vmem, size = 0x2000, scoped, tag = 'output window, operand 0, single buffered']
    %10 = vsyncpa [#allocation3], 0
    %11 = vsyncpa [#allocation6], 0
    %12 = vsyncpa [#allocation4], 0
    // Predicated region
    $region2: #{tpu_custom_call.1} parent=1 // pred_check
      _
    $region3: #{tpu_custom_call.1} parent=1 // pred_check_branch
      %14 = sbr.rel (0) target = $region5
    $region4: #{tpu_custom_call.1} parent=1 // pred_region
      %s16 = ssub.s32 128, 128
      %17 = vsyncadd [#allocation3], %s16
      %s18 = sshll.u32 [#allocation2], 4
      %s19 = int_to_ptr.vmem [resolvable:$true] %s18
      %24 = dma.hbm_to_vmem [thread:$0]  %s0, 128, %s19, [#allocation3], 64, 64, 4
    $region5: #{tpu_custom_call.1} parent=1 // pred_fallthru
      _
    // Predicated region
    $region6: #{tpu_custom_call.1} parent=1 // pred_check
      _
    $region7: #{tpu_custom_call.1} parent=1 // pred_check_branch
      %26 = sbr.rel (0) target = $region9
    $region8: #{tpu_custom_call.1} parent=1 // pred_region
      %s28 = ssub.s32 1024, 1024
      %29 = vsyncadd [#allocation6], %s28
      %s30 = sshll.u32 [#allocation5], 4
      %s31 = int_to_ptr.vmem [resolvable:$true] %s30
      %36 = dma.hbm_to_vmem [thread:$0]  %s1, 1024, %s31, [#allocation6], 64, 64, 4
    $region9: #{tpu_custom_call.1} parent=1 // pred_fallthru
      _
    // Predicated region
    $region10: #{tpu_custom_call.1} parent=1 // pred_check
      _
    $region11: #{tpu_custom_call.1} parent=1 // pred_check_branch
      %38 = sbr.rel (0) target = $region13
    $region12: #{tpu_custom_call.1} parent=1 // pred_region
      _
    $region13: #{tpu_custom_call.1} parent=1 // pred_fallthru
      _
    // Predicated region
    $region14: #{tpu_custom_call.1} parent=1 // pred_check
      _
    $region15: #{tpu_custom_call.1} parent=1 // pred_check_branch
      %40 = sbr.rel (0) target = $region17
    $region16: #{tpu_custom_call.1} parent=1 // pred_region
      %s42 = ssub.s32 1024, 1024
      %43 = vsyncadd [#allocation6], %s42
      %s44 = sshll.u32 [#allocation7], 4
      %s45 = int_to_ptr.vmem [resolvable:$true] %s44
      %50 = dma.hbm_to_vmem [thread:$0]  %s3, 1024, %s45, [#allocation6], 64, 64, 4
    $region17: #{tpu_custom_call.1} parent=1 // pred_fallthru
      _
    // Predicated region
    $region18: #{tpu_custom_call.1} parent=1 // pred_check
      _
    $region19: #{tpu_custom_call.1} parent=1 // pred_check_branch
      %52 = sbr.rel (0) target = $region21
    $region20: #{tpu_custom_call.1} parent=1 // pred_region
      _
    $region21: #{tpu_custom_call.1} parent=1 // pred_fallthru
      _
    // Predicated region
    $region22: #{tpu_custom_call.1} parent=1 // pred_check
      _
    $region23: #{tpu_custom_call.1} parent=1 // pred_check_branch
      %54 = sbr.rel (0) target = $region25
    $region24: #{tpu_custom_call.1} parent=1 // pred_region
      %55 = dma.done [#allocation3], 128
    $region25: #{tpu_custom_call.1} parent=1 // pred_fallthru
      _
    // Predicated region
    $region26: #{tpu_custom_call.1} parent=1 // pred_check
      _
    $region27: #{tpu_custom_call.1} parent=1 // pred_check_branch
      %57 = sbr.rel (0) target = $region29
    $region28: #{tpu_custom_call.1} parent=1 // pred_region
      %58 = dma.done [#allocation6], 1024
    $region29: #{tpu_custom_call.1} parent=1 // pred_fallthru
      _
    // Predicated region
    $region30: #{tpu_custom_call.1} parent=1 // pred_check
      _
    $region31: #{tpu_custom_call.1} parent=1 // pred_check_branch
      %60 = sbr.rel (0) target = $region33
    $region32: #{tpu_custom_call.1} parent=1 // pred_region
      %61 = dma.done [#allocation6], 1024
    $region33: #{tpu_custom_call.1} parent=1 // pred_fallthru
      _
    %v63 = vld [vmem:[#allocation2] sm:$0xf]
    %v64 = vld [vmem:[#allocation2 + $0x4] sm:$0xf]
    %v65 = vld [vmem:[#allocation5] sm:$0xf]
    %v66 = vld [vmem:[#allocation5 + $0x4] sm:$0xf]
    %v67 = vld [vmem:[#allocation5 + $0x8] sm:$0xf]
    %v68 = vld [vmem:[#allocation5 + $0xc] sm:$0xf]
    %v69 = vld [vmem:[#allocation5 + $0x10] sm:$0xf]
    %v70 = vld [vmem:[#allocation5 + $0x14] sm:$0xf]
    %v71 = vld [vmem:[#allocation5 + $0x18] sm:$0xf]
    %v72 = vld [vmem:[#allocation5 + $0x1c] sm:$0xf]
    %v73 = vld [vmem:[#allocation5 + $0x20] sm:$0xf]
    %v74 = vld [vmem:[#allocation5 + $0x24] sm:$0xf]
    %v75 = vld [vmem:[#allocation5 + $0x28] sm:$0xf]
    %v76 = vld [vmem:[#allocation5 + $0x2c] sm:$0xf]
    %v77 = vld [vmem:[#allocation5 + $0x30] sm:$0xf]
    %v78 = vld [vmem:[#allocation5 + $0x34] sm:$0xf]
    %v79 = vld [vmem:[#allocation5 + $0x38] sm:$0xf]
    %v80 = vld [vmem:[#allocation5 + $0x3c] sm:$0xf]
    %v81 = vld [vmem:[%s2] sm:$0x1]
    %v83 = vlaneseq
    %v84 = vshrl.u32 %v83, 7
    %v85 = vsub.s32 0, %v84
    %v86 = vrot.slane %v81, %v85
    %v90 = vunpack.c.l.b16 %v63
    %v91 = vunpack.c.l.b16 %v64
    %v92 = vpack.c.b16 %v91, %v90
    %v110 = vunpack.c.l.b16 %v65
    %v111 = vunpack.c.l.b16 %v66
    %v112 = vunpack.c.l.b16 %v67
    %v113 = vunpack.c.l.b16 %v68
    %v114 = vunpack.c.l.b16 %v69
    %v115 = vunpack.c.l.b16 %v70
    %v116 = vunpack.c.l.b16 %v71
    %v117 = vunpack.c.l.b16 %v72
    %v118 = vunpack.c.l.b16 %v73
    %v119 = vunpack.c.l.b16 %v74
    %v120 = vunpack.c.l.b16 %v75
    %v121 = vunpack.c.l.b16 %v76
    %v122 = vunpack.c.l.b16 %v77
    %v123 = vunpack.c.l.b16 %v78
    %v124 = vunpack.c.l.b16 %v79
    %v125 = vunpack.c.l.b16 %v80
    %v126 = vpack.c.b16 %v111, %v110
    %v127 = vpack.c.b16 %v113, %v112
    %v128 = vpack.c.b16 %v115, %v114
    %v129 = vpack.c.b16 %v117, %v116
    %v130 = vpack.c.b16 %v119, %v118
    %v131 = vpack.c.b16 %v121, %v120
    %v132 = vpack.c.b16 %v123, %v122
    %v133 = vpack.c.b16 %v125, %v124
    %142 = vmatprep.subr.bf16.mxu0 0
    %143 = vmatpush1.bf16.msra.mxu0 %v133
    %144 = vmatprep.subr.bf16.mxu0 0
    %145 = vmatpush1.bf16.msra.mxu0 %v132
    %146 = vmatprep.subr.bf16.mxu0 0
    %147 = vmatpush1.bf16.msra.mxu0 %v131
    %148 = vmatprep.subr.bf16.mxu0 0
    %149 = vmatpush1.bf16.msra.mxu0 %v130
    %150 = vmatprep.subr.bf16.mxu0 0
    %151 = vmatpush1.bf16.msra.mxu0 %v129
    %152 = vmatprep.subr.bf16.mxu0 0
    %153 = vmatpush1.bf16.msra.mxu0 %v128
    %154 = vmatprep.subr.bf16.mxu0 0
    %155 = vmatpush1.bf16.msra.mxu0 %v127
    %156 = vmatprep.subr.bf16.mxu0 0
    %157 = vmatpush1.bf16.msra.mxu0 %v126
    %158 = vmatprep.subr.bf16.mxu0 0
    %159 = vmatpush2.bf16.msra.mxu0 0
    %160 = vmatprep.subr.bf16.mxu0 0
    %161 = vmatpush2.bf16.msra.mxu0 0
    %162 = vmatprep.subr.bf16.mxu0 0
    %163 = vmatpush2.bf16.msra.mxu0 0
    %164 = vmatprep.subr.bf16.mxu0 0
    %165 = vmatpush2.bf16.msra.mxu0 0
    %166 = vmatprep.subr.bf16.mxu0 0
    %167 = vmatpush2.bf16.msra.mxu0 0
    %168 = vmatprep.subr.bf16.mxu0 0
    %169 = vmatpush2.bf16.msra.mxu0 0
    %170 = vmatprep.subr.bf16.mxu0 0
    %171 = vmatpush2.bf16.msra.mxu0 0
    %172 = vmatprep.subr.bf16.mxu0 0
    %173 = vmatpush2.bf16.msra.mxu0 0
    %174 = vmatprep.mubr.bf16.mxu0 0
    %175 = vmatmul.mubr.bf16.gmra.mxu0 %v92
    %v176 = vpop.f32.mrf.mxu0
    %v177 = vadd.f32 %v86, %v176
    %v178 = vpop.f32.mrf.mxu0
    %v179 = vpop.f32.mrf.mxu0
    %v180 = vadd.f32 %v86, %v179
    %v181 = vpop.f32.mrf.mxu0
    %182 = vdwg.mxu0
    %v183 = vmul.f32 %v177, 0.5
    %v184 = vmul.f32 %v180, 0.5
    %v185 = vmul.f32 %v177, 0.70710677
    %v186 = vmul.f32 %v180, 0.70710677
    %v187 = verf.f32.pop %v185
    %v188 = verf.f32.pop %v186
    %v189 = vadd.f32 %v187, 1.0
    %v190 = vadd.f32 %v188, 1.0
    %v191 = vmul.f32 %v183, %v189
    %v192 = vmul.f32 %v184, %v190
    %v193 = vpack.c.bf16 %v192, %v191
    %v194 = vld [vmem:[#allocation7] sm:$0xf]
    %v195 = vld [vmem:[#allocation7 + $0x4] sm:$0xf]
    %v196 = vld [vmem:[#allocation7 + $0x8] sm:$0xf]
    %v197 = vld [vmem:[#allocation7 + $0xc] sm:$0xf]
    %v198 = vld [vmem:[#allocation7 + $0x10] sm:$0xf]
    %v199 = vld [vmem:[#allocation7 + $0x14] sm:$0xf]
    %v200 = vld [vmem:[#allocation7 + $0x18] sm:$0xf]
    %v201 = vld [vmem:[#allocation7 + $0x1c] sm:$0xf]
    %v202 = vld [vmem:[#allocation7 + $0x20] sm:$0xf]
    %v203 = vld [vmem:[#allocation7 + $0x24] sm:$0xf]
    %v204 = vld [vmem:[#allocation7 + $0x28] sm:$0xf]
    %v205 = vld [vmem:[#allocation7 + $0x2c] sm:$0xf]
    %v206 = vld [vmem:[#allocation7 + $0x30] sm:$0xf]
    %v207 = vld [vmem:[#allocation7 + $0x34] sm:$0xf]
    %v208 = vld [vmem:[#allocation7 + $0x38] sm:$0xf]
    %v209 = vld [vmem:[#allocation7 + $0x3c] sm:$0xf]
    %v210 = vld [vmem:[%s4] sm:$0x1]
    %v212 = vlaneseq
    %v213 = vshrl.u32 %v212, 7
    %v214 = vsub.s32 0, %v213
    %v215 = vrot.slane %v210, %v214
    %v233 = vunpack.c.l.b16 %v194
    %v234 = vunpack.c.l.b16 %v195
    %v235 = vunpack.c.l.b16 %v196
    %v236 = vunpack.c.l.b16 %v197
    %v237 = vunpack.c.l.b16 %v198
    %v238 = vunpack.c.l.b16 %v199
    %v239 = vunpack.c.l.b16 %v200
    %v240 = vunpack.c.l.b16 %v201
    %v241 = vunpack.c.l.b16 %v202
    %v242 = vunpack.c.l.b16 %v203
    %v243 = vunpack.c.l.b16 %v204
    %v244 = vunpack.c.l.b16 %v205
    %v245 = vunpack.c.l.b16 %v206
    %v246 = vunpack.c.l.b16 %v207
    %v247 = vunpack.c.l.b16 %v208
    %v248 = vunpack.c.l.b16 %v209
    %v249 = vpack.c.b16 %v234, %v233
    %v250 = vpack.c.b16 %v236, %v235
    %v251 = vpack.c.b16 %v238, %v237
    %v252 = vpack.c.b16 %v240, %v239
    %v253 = vpack.c.b16 %v242, %v241
    %v254 = vpack.c.b16 %v244, %v243
    %v255 = vpack.c.b16 %v246, %v245
    %v256 = vpack.c.b16 %v248, %v247
    %265 = vmatprep.subr.bf16.mxu0 0
    %266 = vmatpush1.bf16.msra.mxu0 %v256
    %267 = vmatprep.subr.bf16.mxu0 0
    %268 = vmatpush1.bf16.msra.mxu0 %v255
    %269 = vmatprep.subr.bf16.mxu0 0
    %270 = vmatpush1.bf16.msra.mxu0 %v254
    %271 = vmatprep.subr.bf16.mxu0 0
    %272 = vmatpush1.bf16.msra.mxu0 %v253
    %273 = vmatprep.subr.bf16.mxu0 0
    %274 = vmatpush1.bf16.msra.mxu0 %v252
    %275 = vmatprep.subr.bf16.mxu0 0
    %276 = vmatpush1.bf16.msra.mxu0 %v251
    %277 = vmatprep.subr.bf16.mxu0 0
    %278 = vmatpush1.bf16.msra.mxu0 %v250
    %279 = vmatprep.subr.bf16.mxu0 0
    %280 = vmatpush1.bf16.msra.mxu0 %v249
    %281 = vmatprep.subr.bf16.mxu0 0
    %282 = vmatpush2.bf16.msra.mxu0 0
    %283 = vmatprep.subr.bf16.mxu0 0
    %284 = vmatpush2.bf16.msra.mxu0 0
    %285 = vmatprep.subr.bf16.mxu0 0
    %286 = vmatpush2.bf16.msra.mxu0 0
    %287 = vmatprep.subr.bf16.mxu0 0
    %288 = vmatpush2.bf16.msra.mxu0 0
    %289 = vmatprep.subr.bf16.mxu0 0
    %290 = vmatpush2.bf16.msra.mxu0 0
    %291 = vmatprep.subr.bf16.mxu0 0
    %292 = vmatpush2.bf16.msra.mxu0 0
    %293 = vmatprep.subr.bf16.mxu0 0
    %294 = vmatpush2.bf16.msra.mxu0 0
    %295 = vmatprep.subr.bf16.mxu0 0
    %296 = vmatpush2.bf16.msra.mxu0 0
    %297 = vmatprep.mubr.bf16.mxu0 0
    %298 = vmatmul.mubr.bf16.gmra.mxu0 %v193
    %v299 = vpop.f32.mrf.mxu0
    %v300 = vadd.f32 %v215, %v299
    %v301 = vpop.f32.mrf.mxu0
    %v302 = vpop.f32.mrf.mxu0
    %v303 = vadd.f32 %v215, %v302
    %v304 = vpop.f32.mrf.mxu0
    %305 = vdwg.mxu0
    %306 = vst [vmem:[#allocation8] sm:$0xff] %v300
    %307 = vst [vmem:[#allocation8 + $0x8] sm:$0xff] %v303
    // Predicated region
    $region34: #{tpu_custom_call.1} parent=1 // pred_check
      _
    $region35: #{tpu_custom_call.1} parent=1 // pred_check_branch
      %309 = sbr.rel (0) target = $region37
    $region36: #{tpu_custom_call.1} parent=1 // pred_region
      %s311 = ssub.s32 256, 256
      %312 = vsyncadd [#allocation4], %s311
      %s313 = sshll.u32 [#allocation8], 4
      %s314 = int_to_ptr.vmem [resolvable:$true] %s313
      %319 = dma.vmem_to_hbm [thread:$0]  %s314, 256, %s5, [#allocation4], 128, 128, 8
    $region37: #{tpu_custom_call.1} parent=1 // pred_fallthru
      _
    // Predicated region
    $region38: #{tpu_custom_call.1} parent=1 // pred_check
      _
    $region39: #{tpu_custom_call.1} parent=1 // pred_check_branch
      %321 = sbr.rel (0) target = $region41
    $region40: #{tpu_custom_call.1} parent=1 // pred_region
      %322 = dma.done [#allocation4], 256
    $region41: #{tpu_custom_call.1} parent=1 // pred_fallthru
      _
    %323 = vsyncpa [#allocation3], 1
    %324 = vsyncpa [#allocation6], 1
    %325 = vsyncpa [#allocation4], 1

</llo_original>
